<compile_context>
chip_gen: v5e
topology: v5e:2x2
jax: 0.10.0
libtpu: 0.0.40
codegen_flags: <defaults>
</compile_context>

<pallas_src>
import jax
import jax.numpy as jnp
from jax.experimental import pallas as pl
from jax.experimental.pallas import tpu as pltpu

# ---- synthetic model configuration (the PyTorch module leaves `model` abstract) ----
NUM_INLIER = 6
NUM_OUTLIER = 2
NUM_CLASSES = NUM_INLIER + NUM_OUTLIER
LAMBDA_COARSE = 0.1
FEAT_DIM = 32          # backbone feature width
KH = KW = 3            # conv kernel size


# -------------------------------------------------------------------------
# Fused forward kernel: conv-as-single-GEMM + bias + ReLU + MXU global
# average pool + fc head + exact softmax + OOD score.
#   patches_ref : [1, M, KC]        bf16   (M = Bblk*H*W, KC = 9*C)
#   w_ref       : [KC, FEAT_DIM]    bf16
#   b_ref       : [1, FEAT_DIM]     f32
#   pool_ref    : [Bblk, M]         f32    (1/(H*W) on rows of image i, else 0)
#   fcw_ref     : [FEAT_DIM, NUM_CLASSES] f32
#   fcb_ref     : [1, NUM_CLASSES]  f32
# -------------------------------------------------------------------------
def _fused_forward_kernel(patches_ref, w_ref, b_ref, pool_ref, fcw_ref, fcb_ref,
                          feat_ref, logits_ref, probs_ref, ood_ref):
    # Single K = 9*C GEMM (bf16 operands, f32 accumulation).
    acc = jnp.dot(patches_ref[0], w_ref[...],
                  preferred_element_type=jnp.float32)            # [M, FEAT_DIM]
    relu = jnp.maximum(acc + b_ref[...], 0.0)                    # f32

    # Global average pool on the MXU; pool matrix carries the 1/(H*W) scale.
    feat = jnp.dot(pool_ref[...], relu,
                   preferred_element_type=jnp.float32)           # [Bblk, FEAT_DIM]
    feat_ref[0] = feat

    # Classifier head.
    logits = jnp.dot(feat, fcw_ref[...],
                     preferred_element_type=jnp.float32) + fcb_ref[...]
    logits_ref[0] = logits

    # Exact softmax (f32 division) so probs sum to 1 at f32 precision.
    m = jnp.max(logits, axis=-1, keepdims=True)
    e = jnp.exp(logits - m)
    probs = e / jnp.sum(e, axis=-1, keepdims=True)
    probs_ref[0] = probs

    # Fused OOD score: sum of outlier-class probabilities.
    col = jax.lax.broadcasted_iota(jnp.int32, probs.shape, 1)
    outlier = jnp.where(col >= NUM_INLIER, probs, jnp.zeros_like(probs))
    ood_ref[0] = jnp.sum(outlier, axis=-1, keepdims=True)


@jax.jit
def hod_detector_forward(x_nchw, params):
    """Fused forward.  Returns (feature, logits, probs, ood_score); the first
    three match HODDetector.forward, ood_score == get_ood_score(probs)."""
    B, C, H, W = x_nchw.shape
    HW = H * W
    KC = KH * KW * C

    # ---- wrapper-side im2col (input read once; minor dim 9*C, not C=4) ----
    x_nhwc = jnp.transpose(x_nchw, (0, 2, 3, 1))
    x_pad = jnp.pad(x_nhwc, ((0, 0), (1, 1), (1, 1), (0, 0)))
    taps = [x_pad[:, dy:dy + H, dx:dx + W, :]
            for dy in range(KH) for dx in range(KW)]
    patches = jnp.concatenate(taps, axis=-1).reshape(B, HW, KC)
    patches = patches.astype(jnp.bfloat16)                       # MXU operand only

    # ---- batch blocking: Bblk images per grid step, >= 2 steps when B >= 2 ----
    Bblk = max(1, min(8, B // 2))
    G = pl.cdiv(B, Bblk)
    Bp = G * Bblk
    if Bp != B:
        patches = jnp.pad(patches, ((0, Bp - B), (0, 0), (0, 0)))
    M = Bblk * HW
    patches = patches.reshape(G, M, KC)

    # Pooling matrix: pool[i, m] = 1/(H*W) if row m belongs to image i of the block.
    row_id = jnp.arange(Bblk, dtype=jnp.int32)[:, None]
    col_id = jnp.arange(M, dtype=jnp.int32)[None, :] // HW
    pool = jnp.where(col_id == row_id, 1.0 / HW, 0.0).astype(jnp.float32)

    conv_w = params["conv_w"].astype(jnp.bfloat16)    # [KC, FEAT_DIM]
    conv_b = params["conv_b"]                         # [1, FEAT_DIM]  f32
    fc_w = params["fc_w"]                             # [FEAT_DIM, NUM_CLASSES]
    fc_b = params["fc_b"]                             # [1, NUM_CLASSES]

    # Per-step VMEM footprint is tiny (<1 MiB) at these sizes; if H/W/C scale,
    # tile the spatial dim and set vmem_limit_bytes explicitly for v7x (64 MiB).
    feat3, logits3, probs3, ood3 = pl.pallas_call(
        _fused_forward_kernel,
        out_shape=(jax.ShapeDtypeStruct((G, Bblk, FEAT_DIM), jnp.float32),
                   jax.ShapeDtypeStruct((G, Bblk, NUM_CLASSES), jnp.float32),
                   jax.ShapeDtypeStruct((G, Bblk, NUM_CLASSES), jnp.float32),
                   jax.ShapeDtypeStruct((G, Bblk, 1), jnp.float32)),
        grid=(G,),
        in_specs=[
            pl.BlockSpec((1, M, KC), lambda g: (g, 0, 0)),               # patches
            pl.BlockSpec((KC, FEAT_DIM), lambda g: (0, 0)),              # conv_w
            pl.BlockSpec((1, FEAT_DIM), lambda g: (0, 0)),               # conv_b
            pl.BlockSpec((Bblk, M), lambda g: (0, 0)),                   # pool matrix
            pl.BlockSpec((FEAT_DIM, NUM_CLASSES), lambda g: (0, 0)),     # fc_w
            pl.BlockSpec((1, NUM_CLASSES), lambda g: (0, 0)),            # fc_b
        ],
        out_specs=(pl.BlockSpec((1, Bblk, FEAT_DIM), lambda g: (g, 0, 0)),
                   pl.BlockSpec((1, Bblk, NUM_CLASSES), lambda g: (g, 0, 0)),
                   pl.BlockSpec((1, Bblk, NUM_CLASSES), lambda g: (g, 0, 0)),
                   pl.BlockSpec((1, Bblk, 1), lambda g: (g, 0, 0))),
        compiler_params=pltpu.CompilerParams(
            dimension_semantics=("parallel",)),
    )(patches, conv_w, conv_b, pool, fc_w, fc_b)

    feature = feat3.reshape(Bp, FEAT_DIM)[:B]
    logits = logits3.reshape(Bp, NUM_CLASSES)[:B]
    probs = probs3.reshape(Bp, NUM_CLASSES)[:B]
    ood_score = ood3.reshape(Bp)[:B]
    return feature, logits, probs, ood_score


# -------------------------------------------------------------------------
# HODLoss criterion and standalone OOD score: deliberately plain jnp/XLA.
# A standalone [B, 8] pallas_call costs more in launch/DMA fixed overhead than
# the math it performs (perf review); the OOD score is also a fused output of
# the forward kernel above.
# -------------------------------------------------------------------------
@jax.jit
def hod_criterion(logits, labels):
    labels = labels.astype(jnp.int32)
    log_probs = jax.nn.log_softmax(logits, axis=-1)
    fine_loss = -jnp.mean(jnp.take_along_axis(log_probs, labels[:, None], axis=-1))
    probs = jnp.exp(log_probs)
    outlier_p = jnp.sum(probs[:, NUM_INLIER:], axis=-1)
    coarse_y = (labels >= NUM_INLIER).astype(jnp.float32)
    # TODO(synk): torch.BCELoss clamps the log terms at -100; we clamp p
    # instead (equivalent except at exact saturation).
    eps = 1e-12
    p = jnp.clip(outlier_p, eps, 1.0 - eps)
    bce = -(coarse_y * jnp.log(p) + (1.0 - coarse_y) * jnp.log(1.0 - p))
    coarse_loss = jnp.mean(bce)
    return fine_loss + LAMBDA_COARSE * coarse_loss


@jax.jit
def hod_get_ood_score(probs):
    """API-parity helper; the fused forward already returns the same score."""
    return jnp.sum(probs[:, NUM_INLIER:], axis=-1)


# -------------------------------------------------------------------------
# Parameter init (synthetic backbone: conv3x3 -> ReLU -> GAP -> linear head).
# conv_w rows are ordered tap-major, channel-minor to match the im2col concat.
# -------------------------------------------------------------------------
def init_params(c_in, key):
    k1, k2, k3, k4 = jax.random.split(key, 4)
    conv_w = 0.1 * jax.random.normal(k1, (KH * KW * c_in, FEAT_DIM), jnp.float32)
    conv_b = 0.1 * jax.random.normal(k2, (1, FEAT_DIM), jnp.float32)
    fc_w = 0.1 * jax.random.normal(k3, (FEAT_DIM, NUM_CLASSES), jnp.float32)
    fc_b = 0.1 * jax.random.normal(k4, (1, NUM_CLASSES), jnp.float32)
    return dict(conv_w=conv_w, conv_b=conv_b, fc_w=fc_w, fc_b=fc_b)


if __name__ == "__main__":
    key = jax.random.PRNGKey(0)
    k_x, k_p, k_l = jax.random.split(key, 3)

    B, C, H, W = 2, 4, 16, 16
    x = jax.random.normal(k_x, (B, C, H, W), jnp.float32)
    params = init_params(C, k_p)

    feature, logits, probs, ood_score = hod_detector_forward(x, params)

    labels = jax.random.randint(k_l, (B,), 0, NUM_CLASSES, dtype=jnp.int32)
    loss = hod_criterion(logits, labels)
    ood_score2 = hod_get_ood_score(probs)

    jax.block_until_ready((feature, logits, probs, ood_score, loss, ood_score2))

    # Pure-JAX f32 reference of the same synthetic backbone for tolerance check.
    def ref_forward(x_nchw):
        xt = jnp.transpose(x_nchw, (0, 2, 3, 1))
        xp = jnp.pad(xt, ((0, 0), (1, 1), (1, 1), (0, 0)))
        taps = [xp[:, dy:dy + H, dx:dx + W, :]
                for dy in range(KH) for dx in range(KW)]
        patches = jnp.concatenate(taps, axis=-1).reshape(B, H * W, KH * KW * C)
        conv = jnp.maximum(patches @ params["conv_w"] + params["conv_b"], 0.0)
        feat = jnp.mean(conv, axis=1)
        lg = feat @ params["fc_w"] + params["fc_b"]
        return feat, lg, jax.nn.softmax(lg, axis=-1)

    feat_r, logits_r, probs_r = ref_forward(x)

    assert feature.shape == (B, FEAT_DIM)
    assert logits.shape == (B, NUM_CLASSES)
    assert probs.shape == (B, NUM_CLASSES)
    assert ood_score.shape == (B,)
    assert bool(jnp.all(jnp.abs(jnp.sum(probs, axis=-1) - 1.0) < 1e-5))
    # bf16 MXU operands in the kernel -> loose tolerance vs the f32 reference.
    assert bool(jnp.all(jnp.abs(feature - feat_r) < 3e-2))
    assert bool(jnp.all(jnp.abs(logits - logits_r) < 3e-2))
    assert bool(jnp.all(jnp.abs(probs - probs_r) < 3e-2))
    assert bool(jnp.all(jnp.abs(ood_score - ood_score2) < 1e-6))
    assert bool(jnp.isfinite(loss))
    print("KERNEL_OK")
</pallas_src>

<mosaic_0001>
module attributes {stable_mosaic.version = 11 : i64} {
  func.func @_fused_forward_kernel(%arg0: i32, %arg1: memref<1x256x36xbf16, #tpu.memory_space<vmem>>, %arg2: memref<36x32xbf16, #tpu.memory_space<vmem>>, %arg3: memref<1x32xf32, #tpu.memory_space<vmem>>, %arg4: memref<1x256xf32, #tpu.memory_space<vmem>>, %arg5: memref<32x8xf32, #tpu.memory_space<vmem>>, %arg6: memref<1x8xf32, #tpu.memory_space<vmem>>, %arg7: memref<1x1x32xf32, #tpu.memory_space<vmem>>, %arg8: memref<1x1x8xf32, #tpu.memory_space<vmem>>, %arg9: memref<1x1x8xf32, #tpu.memory_space<vmem>>, %arg10: memref<1x1x1xf32, #tpu.memory_space<vmem>>) attributes {dimension_semantics = [#tpu.dimension_semantics<parallel>], iteration_bounds = array<i64: 2>, scalar_prefetch = 0 : i64, scratch_operands = 0 : i64, tpu.core_type = #tpu.core_type<tc>, window_params = [{transform_indices = @transform_0, window_bounds = array<i64: 1, 256, 36>}, {pipeline_mode = #tpu.pipeline_mode<synchronous>, transform_indices = @transform_1, window_bounds = array<i64: 36, 32>}, {pipeline_mode = #tpu.pipeline_mode<synchronous>, transform_indices = @transform_2, window_bounds = array<i64: 1, 32>}, {pipeline_mode = #tpu.pipeline_mode<synchronous>, transform_indices = @transform_3, window_bounds = array<i64: 1, 256>}, {pipeline_mode = #tpu.pipeline_mode<synchronous>, transform_indices = @transform_4, window_bounds = array<i64: 32, 8>}, {pipeline_mode = #tpu.pipeline_mode<synchronous>, transform_indices = @transform_5, window_bounds = array<i64: 1, 8>}, {transform_indices = @transform_6, window_bounds = array<i64: 1, 1, 32>}, {transform_indices = @transform_7, window_bounds = array<i64: 1, 1, 8>}, {transform_indices = @transform_8, window_bounds = array<i64: 1, 1, 8>}, {transform_indices = @transform_9, window_bounds = array<i64: 1, 1, 1>}]} {
    %c0 = arith.constant 0 : index
    %c0_0 = arith.constant 0 : index
    %c0_1 = arith.constant 0 : index
    %0 = vector.load %arg1[%c0, %c0_0, %c0_1] : memref<1x256x36xbf16, #tpu.memory_space<vmem>>, vector<1x256x36xbf16>
    %1 = vector.shape_cast %0 : vector<1x256x36xbf16> to vector<256x36xbf16>
    %c0_2 = arith.constant 0 : index
    %c0_3 = arith.constant 0 : index
    %2 = vector.load %arg2[%c0_2, %c0_3] : memref<36x32xbf16, #tpu.memory_space<vmem>>, vector<36x32xbf16>
    %cst = arith.constant dense<0.000000e+00> : vector<256x32xf32>
    %3 = tpu.matmul %1, %2, %cst {dimension_numbers = #tpu.dot_dimension_numbers<[1], [0], [0], [1], [0, 0, 1, 1], [], []>} : vector<256x36xbf16>, vector<36x32xbf16>, vector<256x32xf32> -> vector<256x32xf32>
    %c0_4 = arith.constant 0 : index
    %c0_5 = arith.constant 0 : index
    %4 = vector.load %arg3[%c0_4, %c0_5] : memref<1x32xf32, #tpu.memory_space<vmem>>, vector<1x32xf32>
    %5 = vector.broadcast %4 : vector<1x32xf32> to vector<256x32xf32>
    %6 = arith.addf %3, %5 : vector<256x32xf32>
    %cst_6 = arith.constant 0.000000e+00 : f32
    %7 = vector.broadcast %cst_6 : f32 to vector<256x32xf32>
    %8 = arith.maximumf %6, %7 : vector<256x32xf32>
    %c0_7 = arith.constant 0 : index
    %c0_8 = arith.constant 0 : index
    %9 = vector.load %arg4[%c0_7, %c0_8] : memref<1x256xf32, #tpu.memory_space<vmem>>, vector<1x256xf32>
    %cst_9 = arith.constant dense<0.000000e+00> : vector<1x32xf32>
    %10 = tpu.matmul %9, %8, %cst_9 {dimension_numbers = #tpu.dot_dimension_numbers<[1], [0], [0], [1], [0, 0, 1, 1], [], []>} : vector<1x256xf32>, vector<256x32xf32>, vector<1x32xf32> -> vector<1x32xf32>
    %c0_10 = arith.constant 0 : index
    %c0_11 = arith.constant 0 : index
    %c0_12 = arith.constant 0 : index
    %11 = vector.load %arg7[%c0_10, %c0_11, %c0_12] : memref<1x1x32xf32, #tpu.memory_space<vmem>>, vector<1x1x32xf32>
    %12 = vector.shape_cast %11 : vector<1x1x32xf32> to vector<1x32xf32>
    %13 = vector.shape_cast %10 : vector<1x32xf32> to vector<1x1x32xf32>
    tpu.vector_store %arg7[%c0_10, %c0_11, %c0_12], %13 {strides = array<i32>} : memref<1x1x32xf32, #tpu.memory_space<vmem>>, vector<1x1x32xf32>,
    %c0_13 = arith.constant 0 : index
    %c0_14 = arith.constant 0 : index
    %14 = vector.load %arg5[%c0_13, %c0_14] : memref<32x8xf32, #tpu.memory_space<vmem>>, vector<32x8xf32>
    %cst_15 = arith.constant dense<0.000000e+00> : vector<1x8xf32>
    %15 = tpu.matmul %10, %14, %cst_15 {dimension_numbers = #tpu.dot_dimension_numbers<[1], [0], [0], [1], [0, 0, 1, 1], [], []>} : vector<1x32xf32>, vector<32x8xf32>, vector<1x8xf32> -> vector<1x8xf32>
    %c0_16 = arith.constant 0 : index
    %c0_17 = arith.constant 0 : index
    %16 = vector.load %arg6[%c0_16, %c0_17] : memref<1x8xf32, #tpu.memory_space<vmem>>, vector<1x8xf32>
    %17 = arith.addf %15, %16 : vector<1x8xf32>
    %c0_18 = arith.constant 0 : index
    %c0_19 = arith.constant 0 : index
    %c0_20 = arith.constant 0 : index
    %18 = vector.load %arg8[%c0_18, %c0_19, %c0_20] : memref<1x1x8xf32, #tpu.memory_space<vmem>>, vector<1x1x8xf32>
    %19 = vector.shape_cast %18 : vector<1x1x8xf32> to vector<1x8xf32>
    %20 = vector.shape_cast %17 : vector<1x8xf32> to vector<1x1x8xf32>
    tpu.vector_store %arg8[%c0_18, %c0_19, %c0_20], %20 {strides = array<i32>} : memref<1x1x8xf32, #tpu.memory_space<vmem>>, vector<1x1x8xf32>,
    %cst_21 = arith.constant dense<0xFF800000> : vector<1xf32>
    %21 = vector.multi_reduction <maximumf>, %17, %cst_21 [1] : vector<1x8xf32> to vector<1xf32>
    %22 = vector.shape_cast %21 : vector<1xf32> to vector<1x1xf32>
    %23 = vector.broadcast %22 : vector<1x1xf32> to vector<1x8xf32>
    %24 = arith.subf %17, %23 : vector<1x8xf32>
    %25 = math.exp %24 : vector<1x8xf32>
    %cst_22 = arith.constant dense<0.000000e+00> : vector<1xf32>
    %26 = vector.multi_reduction <add>, %25, %cst_22 [1] : vector<1x8xf32> to vector<1xf32>
    %27 = vector.shape_cast %26 : vector<1xf32> to vector<1x1xf32>
    %28 = vector.broadcast %27 : vector<1x1xf32> to vector<1x8xf32>
    %29 = arith.divf %25, %28 : vector<1x8xf32>
    %c0_23 = arith.constant 0 : index
    %c0_24 = arith.constant 0 : index
    %c0_25 = arith.constant 0 : index
    %30 = vector.load %arg9[%c0_23, %c0_24, %c0_25] : memref<1x1x8xf32, #tpu.memory_space<vmem>>, vector<1x1x8xf32>
    %31 = vector.shape_cast %30 : vector<1x1x8xf32> to vector<1x8xf32>
    %32 = vector.shape_cast %29 : vector<1x8xf32> to vector<1x1x8xf32>
    tpu.vector_store %arg9[%c0_23, %c0_24, %c0_25], %32 {strides = array<i32>} : memref<1x1x8xf32, #tpu.memory_space<vmem>>, vector<1x1x8xf32>,
    %33 = tpu.iota {dimensions = array<i32: 1>} : vector<1x8xi32>
    %c6_i32 = arith.constant 6 : i32
    %34 = vector.broadcast %c6_i32 : i32 to vector<1x8xi32>
    %35 = arith.cmpi sge, %33, %34 : vector<1x8xi32>
    %cst_26 = arith.constant 0.000000e+00 : f32
    %36 = vector.broadcast %cst_26 : f32 to vector<1x8xf32>
    %37 = arith.select %35, %29, %36 : vector<1x8xi1>, vector<1x8xf32>
    %cst_27 = arith.constant dense<0.000000e+00> : vector<1xf32>
    %38 = vector.multi_reduction <add>, %37, %cst_27 [1] : vector<1x8xf32> to vector<1xf32>
    %39 = vector.shape_cast %38 : vector<1xf32> to vector<1x1xf32>
    %c0_28 = arith.constant 0 : index
    %c0_29 = arith.constant 0 : index
    %c0_30 = arith.constant 0 : index
    %40 = vector.load %arg10[%c0_28, %c0_29, %c0_30] : memref<1x1x1xf32, #tpu.memory_space<vmem>>, vector<1x1x1xf32>
    %41 = vector.shape_cast %40 : vector<1x1x1xf32> to vector<1x1xf32>
    %42 = vector.shape_cast %39 : vector<1x1xf32> to vector<1x1x1xf32>
    tpu.vector_store %arg10[%c0_28, %c0_29, %c0_30], %42 {strides = array<i32>} : memref<1x1x1xf32, #tpu.memory_space<vmem>>, vector<1x1x1xf32>,
    return
  }
  func.func @transform_0(%arg0: i32) -> (i32, i32, i32) {
    %c0_i32 = arith.constant 0 : i32
    %c0_i32_0 = arith.constant 0 : i32
    %c0_i32_1 = arith.constant 0 : i32
    return %arg0, %c0_i32, %c0_i32_0 : i32, i32, i32
  }
  func.func @transform_1(%arg0: i32) -> (i32, i32) {
    %c0_i32 = arith.constant 0 : i32
    %c0_i32_0 = arith.constant 0 : i32
    %c0_i32_1 = arith.constant 0 : i32
    return %c0_i32, %c0_i32_0 : i32, i32
  }
  func.func @transform_2(%arg0: i32) -> (i32, i32) {
    %c0_i32 = arith.constant 0 : i32
    %c0_i32_0 = arith.constant 0 : i32
    %c0_i32_1 = arith.constant 0 : i32
    return %c0_i32, %c0_i32_0 : i32, i32
  }
  func.func @transform_3(%arg0: i32) -> (i32, i32) {
    %c0_i32 = arith.constant 0 : i32
    %c0_i32_0 = arith.constant 0 : i32
    %c0_i32_1 = arith.constant 0 : i32
    return %c0_i32, %c0_i32_0 : i32, i32
  }
  func.func @transform_4(%arg0: i32) -> (i32, i32) {
    %c0_i32 = arith.constant 0 : i32
    %c0_i32_0 = arith.constant 0 : i32
    %c0_i32_1 = arith.constant 0 : i32
    return %c0_i32, %c0_i32_0 : i32, i32
  }
  func.func @transform_5(%arg0: i32) -> (i32, i32) {
    %c0_i32 = arith.constant 0 : i32
    %c0_i32_0 = arith.constant 0 : i32
    %c0_i32_1 = arith.constant 0 : i32
    return %c0_i32, %c0_i32_0 : i32, i32
  }
  func.func @transform_6(%arg0: i32) -> (i32, i32, i32) {
    %c0_i32 = arith.constant 0 : i32
    %c0_i32_0 = arith.constant 0 : i32
    %c0_i32_1 = arith.constant 0 : i32
    return %arg0, %c0_i32, %c0_i32_0 : i32, i32, i32
  }
  func.func @transform_7(%arg0: i32) -> (i32, i32, i32) {
    %c0_i32 = arith.constant 0 : i32
    %c0_i32_0 = arith.constant 0 : i32
    %c0_i32_1 = arith.constant 0 : i32
    return %arg0, %c0_i32, %c0_i32_0 : i32, i32, i32
  }
  func.func @transform_8(%arg0: i32) -> (i32, i32, i32) {
    %c0_i32 = arith.constant 0 : i32
    %c0_i32_0 = arith.constant 0 : i32
    %c0_i32_1 = arith.constant 0 : i32
    return %arg0, %c0_i32, %c0_i32_0 : i32, i32, i32
  }
  func.func @transform_9(%arg0: i32) -> (i32, i32, i32) {
    %c0_i32 = arith.constant 0 : i32
    %c0_i32_0 = arith.constant 0 : i32
    %c0_i32_1 = arith.constant 0 : i32
    return %arg0, %c0_i32, %c0_i32_0 : i32, i32, i32
  }
}

</mosaic_0001>

<llo_original>
// kernel: hod_detector_forward.1
$region0: #{hod_detector_forward.1}
  #allocation0 [shape = 'u32[]', space=smem, size = 0x4, offset = 0x4, fixed_abs, tag = 'smem constant byte address 0x4 - core index']
  #allocation1 [shape = 'u32[72,128]{1,0:T(1,128)}', space=vmem, size = 0x9000, scoped, tag = 'internal scratch']
  %s0 = inlined_call_operand.vmem [shape: bf16[2,256,36], index: 0, kind: input, shape index: {}]
  %s1 = inlined_call_operand.vmem [shape: bf16[36,32], index: 1, kind: input, shape index: {}]
  %s2 = inlined_call_operand.vmem [shape: f32[1,32], index: 2, kind: input, shape index: {}]
  %s3 = inlined_call_operand.vmem [shape: f32[1,256], index: 3, kind: input, shape index: {}]
  %s4 = inlined_call_operand.vmem [shape: f32[32,8], index: 4, kind: input, shape index: {}]
  %s5 = inlined_call_operand.vmem [shape: f32[1,8], index: 5, kind: input, shape index: {}]
  %s6 = inlined_call_operand.hbm [shape: f32[2,1,32], index: 6, kind: output, shape index: {0}]
  %s7 = inlined_call_operand.hbm [shape: f32[2,1,8], index: 7, kind: output, shape index: {1}]
  %s8 = inlined_call_operand.hbm [shape: f32[2,1,8], index: 8, kind: output, shape index: {2}]
  %s9 = inlined_call_operand.vmem [shape: f32[2,1,1], index: 9, kind: output, shape index: {3}]
  %10 = xla_tuple %s6, %s7, %s8, %s9
  %s11 = sld [smem:[#allocation0]]
  $region81: #{hod_detector_forward.1} parent=0
    _
  %s13 = ssub.s32 1, %s11
  %s14 = scalar_select 0, %s13, %s11
  $region1: #{hod_detector_forward.1} parent=0
    #allocation2 [shape = 'u8[1024]{0}', space=vmem, size = 0x400, scoped, tag = 'output window, operand 0']
    #allocation3 [shape = 's32[2]{0}', space=sflag, size = 0x8, scoped, tag = 'scoped memory for hod_detector_forward.1']
    #allocation4 [shape = 'u8[1024]{0}', space=vmem, size = 0x400, scoped, tag = 'output window, operand 1']
    #allocation5 [shape = 's32[2]{0}', space=sflag, size = 0x8, scoped, tag = 'scoped memory for hod_detector_forward.1']
    #allocation6 [shape = 'u8[1024]{0}', space=vmem, size = 0x400, scoped, tag = 'output window, operand 2']
    %15 = vsyncpa [#allocation3], 0
    %s16 = scalar_lea.sflag [#allocation3], 1
    %17 = vsyncpa %s16, 0
    %18 = vsyncpa [#allocation5], 0
    %s19 = scalar_lea.sflag [#allocation5], 1
    %20 = vsyncpa %s19, 0
    loop: start=0, step=1, limit=4
    $region2: #{hod_detector_forward.1} parent=1 // loop_pre_header
      _
    $region3: #{hod_detector_forward.1} parent=1 // loop_header
      %s22 = sphi 0, %s26
      %p23 = scmp.ge.s32.totalorder %s22, 4
      %s32 = sphi 0, %s34
      %s35 = sphi 0, %s32
      %s36 = sphi 0, %s35
      %s52 = sphi 0, %s36
      %s56 = sphi 0, %s56
      %s58 = sphi 0, %s56
      %s59 = sphi 0, %s58
      %s73 = sphi 0, %s59
      %s77 = sphi 0, %s77
      %s79 = sphi 0, %s77
      %s80 = sphi 0, %s79
      %s94 = sphi 0, %s80
      %s98 = sphi 0, %s98
      %s100 = sphi 0, %s98
      %s101 = sphi 0, %s100
      %s115 = sphi 0, %s101
      %s119 = sphi 0, %s119
      %s121 = sphi 0, %s119
      %s122 = sphi 0, %s121
      %s136 = sphi 0, %s122
      %s140 = sphi 0, %s140
      %s142 = sphi 0, %s140
      %s143 = sphi 0, %s142
      %s157 = sphi 0, %s143
      %s163 = sphi 0, %s165
      %s166 = sphi 0, %s163
      %s167 = sphi 0, %s166
      %s183 = sphi 0, %s167
      %s189 = sphi 0, %s191
      %s192 = sphi 0, %s189
      %s193 = sphi 0, %s192
      %s209 = sphi 0, %s193
      %s215 = sphi 0, %s217
      %s218 = sphi 0, %s215
      %s219 = sphi 0, %s218
      %s235 = sphi 0, %s219
      %s241 = sphi 0, %s243
      %s244 = sphi 0, %s241
      %s245 = sphi 0, %s244
      %s261 = sphi 0, %s245
    $region4: #{hod_detector_forward.1} parent=1 // loop_header_branch
      %25 = sbr.rel (%p23) target = $region8
    $region5: #{hod_detector_forward.1} parent=1 // loop_body
      %s27 = ssub.s32 %s22, 1
      %s28 = ssub.s32 %s22, 2
      %s29 = sadd.s32 %s22, 1
      %s30 = ssub.s32 %s22, %s29
      %p31 = scmp.eq.s32.totalorder %s30, 0
      %s33 = sadd.s32 %s32, 1
      %s34 = scalar_select %p31, %s32, %s33
      %p37 = pneg %p31
      %p38 = scmp.eq.s32.totalorder %s22, 1
      %p39 = por %p37, %p38
      %p40 = scmp.ne.s32.totalorder %s32, %s35
      %p41 = scmp.eq.s32.totalorder %s22, 0
      %p42 = por %p40, %p41
      %p43 = scmp.ne.s32.totalorder %s32, %s35
      %p44 = scmp.eq.s32.totalorder %s27, 1
      %p45 = por %p43, %p44
      %p46 = scmp.ne.s32.totalorder %s35, %s36
      %p47 = scmp.eq.s32.totalorder %s27, 0
      %p48 = por %p46, %p47
      %p49 = scmp.ne.s32.totalorder %s35, %s36
      %p50 = scmp.eq.s32.totalorder %s28, 1
      %p51 = por %p49, %p50
      %p53 = scmp.ne.s32.totalorder %s36, %s52
      %p54 = scmp.eq.s32.totalorder %s28, 0
      %p55 = por %p53, %p54
      %s57 = sadd.s32 %s56, 1
      %p60 = scmp.eq.s32.totalorder %s22, 1
      %p61 = scmp.ne.s32.totalorder %s56, %s58
      %p62 = scmp.eq.s32.totalorder %s22, 0
      %p63 = por %p61, %p62
      %p64 = scmp.ne.s32.totalorder %s56, %s58
      %p65 = scmp.eq.s32.totalorder %s27, 1
      %p66 = por %p64, %p65
      %p67 = scmp.ne.s32.totalorder %s58, %s59
      %p68 = scmp.eq.s32.totalorder %s27, 0
      %p69 = por %p67, %p68
      %p70 = scmp.ne.s32.totalorder %s58, %s59
      %p71 = scmp.eq.s32.totalorder %s28, 1
      %p72 = por %p70, %p71
      %p74 = scmp.ne.s32.totalorder %s59, %s73
      %p75 = scmp.eq.s32.totalorder %s28, 0
      %p76 = por %p74, %p75
      %s78 = sadd.s32 %s77, 1
      %p81 = scmp.eq.s32.totalorder %s22, 1
      %p82 = scmp.ne.s32.totalorder %s77, %s79
      %p83 = scmp.eq.s32.totalorder %s22, 0
      %p84 = por %p82, %p83
      %p85 = scmp.ne.s32.totalorder %s77, %s79
      %p86 = scmp.eq.s32.totalorder %s27, 1
      %p87 = por %p85, %p86
      %p88 = scmp.ne.s32.totalorder %s79, %s80
      %p89 = scmp.eq.s32.totalorder %s27, 0
      %p90 = por %p88, %p89
      %p91 = scmp.ne.s32.totalorder %s79, %s80
      %p92 = scmp.eq.s32.totalorder %s28, 1
      %p93 = por %p91, %p92
      %p95 = scmp.ne.s32.totalorder %s80, %s94
      %p96 = scmp.eq.s32.totalorder %s28, 0
      %p97 = por %p95, %p96
      %s99 = sadd.s32 %s98, 1
      %p102 = scmp.eq.s32.totalorder %s22, 1
      %p103 = scmp.ne.s32.totalorder %s98, %s100
      %p104 = scmp.eq.s32.totalorder %s22, 0
      %p105 = por %p103, %p104
      %p106 = scmp.ne.s32.totalorder %s98, %s100
      %p107 = scmp.eq.s32.totalorder %s27, 1
      %p108 = por %p106, %p107
      %p109 = scmp.ne.s32.totalorder %s100, %s101
      %p110 = scmp.eq.s32.totalorder %s27, 0
      %p111 = por %p109, %p110
      %p112 = scmp.ne.s32.totalorder %s100, %s101
      %p113 = scmp.eq.s32.totalorder %s28, 1
      %p114 = por %p112, %p113
      %p116 = scmp.ne.s32.totalorder %s101, %s115
      %p117 = scmp.eq.s32.totalorder %s28, 0
      %p118 = por %p116, %p117
      %s120 = sadd.s32 %s119, 1
      %p123 = scmp.eq.s32.totalorder %s22, 1
      %p124 = scmp.ne.s32.totalorder %s119, %s121
      %p125 = scmp.eq.s32.totalorder %s22, 0
      %p126 = por %p124, %p125
      %p127 = scmp.ne.s32.totalorder %s119, %s121
      %p128 = scmp.eq.s32.totalorder %s27, 1
      %p129 = por %p127, %p128
      %p130 = scmp.ne.s32.totalorder %s121, %s122
      %p131 = scmp.eq.s32.totalorder %s27, 0
      %p132 = por %p130, %p131
      %p133 = scmp.ne.s32.totalorder %s121, %s122
      %p134 = scmp.eq.s32.totalorder %s28, 1
      %p135 = por %p133, %p134
      %p137 = scmp.ne.s32.totalorder %s122, %s136
      %p138 = scmp.eq.s32.totalorder %s28, 0
      %p139 = por %p137, %p138
      %s141 = sadd.s32 %s140, 1
      %p144 = scmp.eq.s32.totalorder %s22, 1
      %p145 = scmp.ne.s32.totalorder %s140, %s142
      %p146 = scmp.eq.s32.totalorder %s22, 0
      %p147 = por %p145, %p146
      %p148 = scmp.ne.s32.totalorder %s140, %s142
      %p149 = scmp.eq.s32.totalorder %s27, 1
      %p150 = por %p148, %p149
      %p151 = scmp.ne.s32.totalorder %s142, %s143
      %p152 = scmp.eq.s32.totalorder %s27, 0
      %p153 = por %p151, %p152
      %p154 = scmp.ne.s32.totalorder %s142, %s143
      %p155 = scmp.eq.s32.totalorder %s28, 1
      %p156 = por %p154, %p155
      %p158 = scmp.ne.s32.totalorder %s143, %s157
      %p159 = scmp.eq.s32.totalorder %s28, 0
      %p160 = por %p158, %p159
      %s161 = ssub.s32 %s22, %s29
      %p162 = scmp.eq.s32.totalorder %s161, 0
      %s164 = sadd.s32 %s163, 1
      %s165 = scalar_select %p162, %s163, %s164
      %p168 = pneg %p162
      %p169 = scmp.eq.s32.totalorder %s22, 1
      %p170 = por %p168, %p169
      %p171 = scmp.ne.s32.totalorder %s163, %s166
      %p172 = scmp.eq.s32.totalorder %s22, 0
      %p173 = por %p171, %p172
      %p174 = scmp.ne.s32.totalorder %s163, %s166
      %p175 = scmp.eq.s32.totalorder %s27, 1
      %p176 = por %p174, %p175
      %p177 = scmp.ne.s32.totalorder %s166, %s167
      %p178 = scmp.eq.s32.totalorder %s27, 0
      %p179 = por %p177, %p178
      %p180 = scmp.ne.s32.totalorder %s166, %s167
      %p181 = scmp.eq.s32.totalorder %s28, 1
      %p182 = por %p180, %p181
      %p184 = scmp.ne.s32.totalorder %s167, %s183
      %p185 = scmp.eq.s32.totalorder %s28, 0
      %p186 = por %p184, %p185
      %s187 = ssub.s32 %s22, %s29
      %p188 = scmp.eq.s32.totalorder %s187, 0
      %s190 = sadd.s32 %s189, 1
      %s191 = scalar_select %p188, %s189, %s190
      %p194 = pneg %p188
      %p195 = scmp.eq.s32.totalorder %s22, 1
      %p196 = por %p194, %p195
      %p197 = scmp.ne.s32.totalorder %s189, %s192
      %p198 = scmp.eq.s32.totalorder %s22, 0
      %p199 = por %p197, %p198
      %p200 = scmp.ne.s32.totalorder %s189, %s192
      %p201 = scmp.eq.s32.totalorder %s27, 1
      %p202 = por %p200, %p201
      %p203 = scmp.ne.s32.totalorder %s192, %s193
      %p204 = scmp.eq.s32.totalorder %s27, 0
      %p205 = por %p203, %p204
      %p206 = scmp.ne.s32.totalorder %s192, %s193
      %p207 = scmp.eq.s32.totalorder %s28, 1
      %p208 = por %p206, %p207
      %p210 = scmp.ne.s32.totalorder %s193, %s209
      %p211 = scmp.eq.s32.totalorder %s28, 0
      %p212 = por %p210, %p211
      %s213 = ssub.s32 %s22, %s29
      %p214 = scmp.eq.s32.totalorder %s213, 0
      %s216 = sadd.s32 %s215, 1
      %s217 = scalar_select %p214, %s215, %s216
      %p220 = pneg %p214
      %p221 = scmp.eq.s32.totalorder %s22, 1
      %p222 = por %p220, %p221
      %p223 = scmp.ne.s32.totalorder %s215, %s218
      %p224 = scmp.eq.s32.totalorder %s22, 0
      %p225 = por %p223, %p224
      %p226 = scmp.ne.s32.totalorder %s215, %s218
      %p227 = scmp.eq.s32.totalorder %s27, 1
      %p228 = por %p226, %p227
      %p229 = scmp.ne.s32.totalorder %s218, %s219
      %p230 = scmp.eq.s32.totalorder %s27, 0
      %p231 = por %p229, %p230
      %p232 = scmp.ne.s32.totalorder %s218, %s219
      %p233 = scmp.eq.s32.totalorder %s28, 1
      %p234 = por %p232, %p233
      %p236 = scmp.ne.s32.totalorder %s219, %s235
      %p237 = scmp.eq.s32.totalorder %s28, 0
      %p238 = por %p236, %p237
      %s239 = ssub.s32 %s22, %s29
      %p240 = scmp.eq.s32.totalorder %s239, 0
      %s242 = sadd.s32 %s241, 1
      %s243 = scalar_select %p240, %s241, %s242
      %p246 = pneg %p240
      %p247 = scmp.eq.s32.totalorder %s22, 1
      %p248 = por %p246, %p247
      %p249 = scmp.ne.s32.totalorder %s241, %s244
      %p250 = scmp.eq.s32.totalorder %s22, 0
      %p251 = por %p249, %p250
      %p252 = scmp.ne.s32.totalorder %s241, %s244
      %p253 = scmp.eq.s32.totalorder %s27, 1
      %p254 = por %p252, %p253
      %p255 = scmp.ne.s32.totalorder %s244, %s245
      %p256 = scmp.eq.s32.totalorder %s27, 0
      %p257 = por %p255, %p256
      %p258 = scmp.ne.s32.totalorder %s244, %s245
      %p259 = scmp.eq.s32.totalorder %s28, 1
      %p260 = por %p258, %p259
      %p262 = scmp.ne.s32.totalorder %s245, %s261
      %p263 = scmp.eq.s32.totalorder %s28, 0
      %p264 = por %p262, %p263
      %p265 = scmp.le.s32.totalorder 1, %s22
      %p266 = scmp.lt.s32.totalorder %s22, 3
      %p267 = pnand %p265, %p266
      %p268 = pneg %p267
      // Predicated region
      $region9: #{hod_detector_forward.1} parent=5 // pred_check
        _
      $region10: #{hod_detector_forward.1} parent=5 // pred_check_branch
        %270 = sbr.rel (%p267) target = $region12
      $region11: #{hod_detector_forward.1} parent=5 // pred_region
        %s271 = ssub.s32 %s22, 1
        // Predicated region
        $region13: #{hod_detector_forward.1} parent=11 // pred_check
          %p272 = pneg %p69
        $region14: #{hod_detector_forward.1} parent=11 // pred_check_branch
          %274 = sbr.rel (%p272) target = $region16
        $region15: #{hod_detector_forward.1} parent=11 // pred_region
          _
        $region16: #{hod_detector_forward.1} parent=11 // pred_fallthru
          _
        // Predicated region
        $region17: #{hod_detector_forward.1} parent=11 // pred_check
          %p275 = pneg %p90
        $region18: #{hod_detector_forward.1} parent=11 // pred_check_branch
          %277 = sbr.rel (%p275) target = $region20
        $region19: #{hod_detector_forward.1} parent=11 // pred_region
          _
        $region20: #{hod_detector_forward.1} parent=11 // pred_fallthru
          _
        // Predicated region
        $region21: #{hod_detector_forward.1} parent=11 // pred_check
          %p278 = pneg %p111
        $region22: #{hod_detector_forward.1} parent=11 // pred_check_branch
          %280 = sbr.rel (%p278) target = $region24
        $region23: #{hod_detector_forward.1} parent=11 // pred_region
          _
        $region24: #{hod_detector_forward.1} parent=11 // pred_fallthru
          _
        // Predicated region
        $region25: #{hod_detector_forward.1} parent=11 // pred_check
          %p281 = pneg %p132
        $region26: #{hod_detector_forward.1} parent=11 // pred_check_branch
          %283 = sbr.rel (%p281) target = $region28
        $region27: #{hod_detector_forward.1} parent=11 // pred_region
          _
        $region28: #{hod_detector_forward.1} parent=11 // pred_fallthru
          _
        // Predicated region
        $region29: #{hod_detector_forward.1} parent=11 // pred_check
          %p284 = pneg %p153
        $region30: #{hod_detector_forward.1} parent=11 // pred_check_branch
          %286 = sbr.rel (%p284) target = $region32
        $region31: #{hod_detector_forward.1} parent=11 // pred_region
          _
        $region32: #{hod_detector_forward.1} parent=11 // pred_fallthru
          _
      $region12: #{hod_detector_forward.1} parent=5 // pred_fallthru
        _
      %p287 = scmp.lt.s32.totalorder %s22, 2
      // Predicated region
      $region33: #{hod_detector_forward.1} parent=5 // pred_check
        %p288 = pneg %p287
      $region34: #{hod_detector_forward.1} parent=5 // pred_check_branch
        %290 = sbr.rel (%p288) target = $region36
      $region35: #{hod_detector_forward.1} parent=5 // pred_region
        // Predicated region
        $region37: #{hod_detector_forward.1} parent=35 // pred_check
          %p291 = pneg %p42
        $region38: #{hod_detector_forward.1} parent=35 // pred_check_branch
          %293 = sbr.rel (%p291) target = $region40
        $region39: #{hod_detector_forward.1} parent=35 // pred_region
          %p294 = scmp.lt.s32.totalorder %s22, 1
          %s295 = scalar_select %p294, %s22, 1
          %s296 = smul.addr %s295, 32
          %s297 = smul.addr %s296, 4
          %s298 = scalar_lea.vmem %s0, %s297
        $region40: #{hod_detector_forward.1} parent=35 // pred_fallthru
          _
      $region36: #{hod_detector_forward.1} parent=5 // pred_fallthru
        _
      %p299 = scmp.le.s32.totalorder 1, %s22
      %p300 = scmp.lt.s32.totalorder %s22, 3
      %p301 = pnand %p299, %p300
      %p302 = pneg %p301
      // Predicated region
      $region41: #{hod_detector_forward.1} parent=5 // pred_check
        _
      $region42: #{hod_detector_forward.1} parent=5 // pred_check_branch
        %304 = sbr.rel (%p301) target = $region44
      $region43: #{hod_detector_forward.1} parent=5 // pred_region
        %s305 = ssub.s32 %s22, 1
        %p306 = scmp.lt.s32.totalorder %s27, 1
        %s307 = scalar_select %p306, %s27, 1
        %s308 = smul.addr %s307, 32
        %s309 = smul.addr %s308, 4
        %s310 = scalar_lea.vmem %s0, %s309
        %p311 = pneg %p48
        %p312 = pneg %p45
        %p313 = pneg %p69
        %p314 = pneg %p66
        %p315 = pneg %p90
        %p316 = pneg %p87
        %p317 = pneg %p111
        %p318 = pneg %p108
        %p319 = pneg %p132
        %p320 = pneg %p129
        %p321 = pneg %p153
        %p322 = pneg %p150
        %p323 = pneg %p179
        %p324 = pneg %p176
        %s325 = sand.u32 %s166, 1
        %s326 = scalar_lea.sflag [#allocation3], %s325
        %s327 = sand.u32 %s166, 1
        %s328 = scalar_lea.vmem [#allocation2], %s327
        %p329 = pneg %p205
        %p330 = pneg %p202
        %s331 = sand.u32 %s27, 1
        %s332 = scalar_lea.sflag [#allocation5], %s331
        %s333 = sand.u32 %s192, 1
        %s334 = scalar_lea.vmem [#allocation4], %s333
        %p335 = pneg %p231
        %p336 = pneg %p228
        %s337 = sand.u32 %s27, 1
        %s338 = scalar_lea.sflag [#allocation5], %s337
        %s339 = sand.u32 %s218, 1
        %s340 = scalar_lea.vmem [#allocation6], %s339
        %p341 = pneg %p257
        %p342 = pneg %p254
        %p343 = scmp.lt.s32.totalorder %s27, 1
        %s344 = scalar_select %p343, %s27, 1
        %s345 = scalar_lea.vmem %s9, %s344
        %p346 = scmp.lt.s32.totalorder %s27, 1
        %s347 = scalar_select %p346, %s27, 1
        %s348 = smul.addr %s347, 32
        %s349 = smul.addr %s348, 4
        %s350 = scalar_lea.vmem %s0, %s349
        %p351 = scmp.lt.s32.totalorder %s27, 1
        %s352 = scalar_select %p351, %s27, 1
        %s353 = scalar_lea.vmem %s9, %s352
        %v355 = vld [vmem:[%s350] sm:$0xf]
        %v356 = vld [vmem:[%s350 + $0x4] sm:$0xf]
        %v357 = vld [vmem:[%s350 + $0x8] sm:$0xf]
        %v358 = vld [vmem:[%s350 + $0xc] sm:$0xf]
        %v359 = vld [vmem:[%s350 + $0x10] sm:$0xf]
        %v360 = vld [vmem:[%s350 + $0x14] sm:$0xf]
        %v361 = vld [vmem:[%s350 + $0x18] sm:$0xf]
        %v362 = vld [vmem:[%s350 + $0x1c] sm:$0xf]
        %v363 = vld [vmem:[%s350 + $0x20] sm:$0xf]
        %v364 = vld [vmem:[%s350 + $0x24] sm:$0xf]
        %v365 = vld [vmem:[%s350 + $0x28] sm:$0xf]
        %v366 = vld [vmem:[%s350 + $0x2c] sm:$0xf]
        %v367 = vld [vmem:[%s350 + $0x30] sm:$0xf]
        %v368 = vld [vmem:[%s350 + $0x34] sm:$0xf]
        %v369 = vld [vmem:[%s350 + $0x38] sm:$0xf]
        %v370 = vld [vmem:[%s350 + $0x3c] sm:$0xf]
        %v371 = vld [vmem:[%s350 + $0x40] sm:$0xf]
        %v372 = vld [vmem:[%s350 + $0x44] sm:$0xf]
        %v373 = vld [vmem:[%s350 + $0x48] sm:$0xf]
        %v374 = vld [vmem:[%s350 + $0x4c] sm:$0xf]
        %v375 = vld [vmem:[%s350 + $0x50] sm:$0xf]
        %v376 = vld [vmem:[%s350 + $0x54] sm:$0xf]
        %v377 = vld [vmem:[%s350 + $0x58] sm:$0xf]
        %v378 = vld [vmem:[%s350 + $0x5c] sm:$0xf]
        %v379 = vld [vmem:[%s350 + $0x60] sm:$0xf]
        %v380 = vld [vmem:[%s350 + $0x64] sm:$0xf]
        %v381 = vld [vmem:[%s350 + $0x68] sm:$0xf]
        %v382 = vld [vmem:[%s350 + $0x6c] sm:$0xf]
        %v383 = vld [vmem:[%s350 + $0x70] sm:$0xf]
        %v384 = vld [vmem:[%s350 + $0x74] sm:$0xf]
        %v385 = vld [vmem:[%s350 + $0x78] sm:$0xf]
        %v386 = vld [vmem:[%s350 + $0x7c] sm:$0xf]
        %v387 = vld [vmem:[%s1] sm:$0xf]
        %v388 = vld [vmem:[%s1 + $0x4] sm:$0xf]
        %v389 = vld [vmem:[%s1 + $0x8] sm:$0xf]
        %v390 = vld [vmem:[%s1 + $0xc] sm:$0xf]
        %v391 = vld [vmem:[%s1 + $0x10] sm:$0x3]
        %v392 = vld [vmem:[%s2] sm:$0x1]
        %v394 = vperm.slane %v392, 0
        %v428 = vunpack.c.l.b16 %v355
        %v429 = vunpack.c.l.b16 %v356
        %v430 = vunpack.c.l.b16 %v357
        %v431 = vunpack.c.l.b16 %v358
        %v432 = vunpack.c.l.b16 %v359
        %v433 = vunpack.c.l.b16 %v360
        %v434 = vunpack.c.l.b16 %v361
        %v435 = vunpack.c.l.b16 %v362
        %v436 = vunpack.c.l.b16 %v363
        %v437 = vunpack.c.l.b16 %v364
        %v438 = vunpack.c.l.b16 %v365
        %v439 = vunpack.c.l.b16 %v366
        %v440 = vunpack.c.l.b16 %v367
        %v441 = vunpack.c.l.b16 %v368
        %v442 = vunpack.c.l.b16 %v369
        %v443 = vunpack.c.l.b16 %v370
        %v444 = vunpack.c.l.b16 %v371
        %v445 = vunpack.c.l.b16 %v372
        %v446 = vunpack.c.l.b16 %v373
        %v447 = vunpack.c.l.b16 %v374
        %v448 = vunpack.c.l.b16 %v375
        %v449 = vunpack.c.l.b16 %v376
        %v450 = vunpack.c.l.b16 %v377
        %v451 = vunpack.c.l.b16 %v378
        %v452 = vunpack.c.l.b16 %v379
        %v453 = vunpack.c.l.b16 %v380
        %v454 = vunpack.c.l.b16 %v381
        %v455 = vunpack.c.l.b16 %v382
        %v456 = vunpack.c.l.b16 %v383
        %v457 = vunpack.c.l.b16 %v384
        %v458 = vunpack.c.l.b16 %v385
        %v459 = vunpack.c.l.b16 %v386
        %v460 = vpack.c.b16 %v429, %v428
        %v461 = vpack.c.b16 %v431, %v430
        %v462 = vpack.c.b16 %v433, %v432
        %v463 = vpack.c.b16 %v435, %v434
        %v464 = vpack.c.b16 %v437, %v436
        %v465 = vpack.c.b16 %v439, %v438
        %v466 = vpack.c.b16 %v441, %v440
        %v467 = vpack.c.b16 %v443, %v442
        %v468 = vpack.c.b16 %v445, %v444
        %v469 = vpack.c.b16 %v447, %v446
        %v470 = vpack.c.b16 %v449, %v448
        %v471 = vpack.c.b16 %v451, %v450
        %v472 = vpack.c.b16 %v453, %v452
        %v473 = vpack.c.b16 %v455, %v454
        %v474 = vpack.c.b16 %v457, %v456
        %v475 = vpack.c.b16 %v459, %v458
        %v481 = vunpack.c.l.b16 %v387
        %v482 = vunpack.c.l.b16 %v388
        %v483 = vunpack.c.l.b16 %v389
        %v484 = vunpack.c.l.b16 %v390
        %v485 = vunpack.c.l.b16 %v391
        %v486 = vpack.c.b16 %v482, %v481
        %v487 = vpack.c.b16 %v484, %v483
        %v488 = vpack.c.b16 %v485, %v485
        %vm491 = vcmask 293888
        %v493 = vsel %vm491, %v460, 0
        %v496 = vsel %vm491, %v461, 0
        %v499 = vsel %vm491, %v462, 0
        %v502 = vsel %vm491, %v463, 0
        %v505 = vsel %vm491, %v464, 0
        %v508 = vsel %vm491, %v465, 0
        %v511 = vsel %vm491, %v466, 0
        %v514 = vsel %vm491, %v467, 0
        %v517 = vsel %vm491, %v468, 0
        %v520 = vsel %vm491, %v469, 0
        %v523 = vsel %vm491, %v470, 0
        %v526 = vsel %vm491, %v471, 0
        %v529 = vsel %vm491, %v472, 0
        %v532 = vsel %vm491, %v473, 0
        %v535 = vsel %vm491, %v474, 0
        %v538 = vsel %vm491, %v475, 0
        %vm540 = vcmask 1041408
        %v542 = vsel %vm540, %v488, 0
        %544 = vmatpush.bf16.msra.mxu0 0
        %545 = vmatpush.bf16.msra.mxu0 0
        %546 = vmatpush.bf16.msra.mxu0 0
        %547 = vmatpush.bf16.msra.mxu0 0
        %548 = vmatpush.bf16.msra.mxu0 0
        %549 = vmatpush.bf16.msra.mxu0 %v542
        %550 = vmatpush.bf16.msra.mxu0 %v487
        %551 = vmatpush.bf16.msra.mxu0 %v486
        %552 = vmatmul.bf16.gmra.mxu0 %v493
        %v553 = vpop.f32.mrf.mxu0
        %v554 = vadd.f32 %v394, %v553
        %v555 = vpop.f32.mrf.mxu0
        %v556 = vadd.f32 %v394, %v555
        %557 = vmatmul.bf16.gmra.mxu0 %v496
        %v558 = vpop.f32.mrf.mxu0
        %v559 = vadd.f32 %v394, %v558
        %v560 = vpop.f32.mrf.mxu0
        %v561 = vadd.f32 %v394, %v560
        %562 = vmatmul.bf16.gmra.mxu0 %v499
        %v563 = vpop.f32.mrf.mxu0
        %v564 = vadd.f32 %v394, %v563
        %v565 = vpop.f32.mrf.mxu0
        %v566 = vadd.f32 %v394, %v565
        %567 = vmatmul.bf16.gmra.mxu0 %v502
        %v568 = vpop.f32.mrf.mxu0
        %v569 = vadd.f32 %v394, %v568
        %v570 = vpop.f32.mrf.mxu0
        %v571 = vadd.f32 %v394, %v570
        %572 = vmatmul.bf16.gmra.mxu0 %v505
        %v573 = vpop.f32.mrf.mxu0
        %v574 = vadd.f32 %v394, %v573
        %v575 = vpop.f32.mrf.mxu0
        %v576 = vadd.f32 %v394, %v575
        %577 = vmatmul.bf16.gmra.mxu0 %v508
        %v578 = vpop.f32.mrf.mxu0
        %v579 = vadd.f32 %v394, %v578
        %v580 = vpop.f32.mrf.mxu0
        %v581 = vadd.f32 %v394, %v580
        %582 = vmatmul.bf16.gmra.mxu0 %v511
        %v583 = vpop.f32.mrf.mxu0
        %v584 = vadd.f32 %v394, %v583
        %v585 = vpop.f32.mrf.mxu0
        %v586 = vadd.f32 %v394, %v585
        %587 = vmatmul.bf16.gmra.mxu0 %v514
        %v588 = vpop.f32.mrf.mxu0
        %v589 = vadd.f32 %v394, %v588
        %v590 = vpop.f32.mrf.mxu0
        %v591 = vadd.f32 %v394, %v590
        %592 = vmatmul.bf16.gmra.mxu0 %v517
        %v593 = vpop.f32.mrf.mxu0
        %v594 = vadd.f32 %v394, %v593
        %v595 = vpop.f32.mrf.mxu0
        %v596 = vadd.f32 %v394, %v595
        %597 = vmatmul.bf16.gmra.mxu0 %v520
        %v598 = vpop.f32.mrf.mxu0
        %v599 = vadd.f32 %v394, %v598
        %v600 = vpop.f32.mrf.mxu0
        %v601 = vadd.f32 %v394, %v600
        %602 = vmatmul.bf16.gmra.mxu0 %v523
        %v603 = vpop.f32.mrf.mxu0
        %v604 = vadd.f32 %v394, %v603
        %v605 = vpop.f32.mrf.mxu0
        %v606 = vadd.f32 %v394, %v605
        %607 = vmatmul.bf16.gmra.mxu0 %v526
        %v608 = vpop.f32.mrf.mxu0
        %v609 = vadd.f32 %v394, %v608
        %v610 = vpop.f32.mrf.mxu0
        %v611 = vadd.f32 %v394, %v610
        %612 = vmatmul.bf16.gmra.mxu0 %v529
        %v613 = vpop.f32.mrf.mxu0
        %v614 = vadd.f32 %v394, %v613
        %v615 = vpop.f32.mrf.mxu0
        %v616 = vadd.f32 %v394, %v615
        %617 = vmatmul.bf16.gmra.mxu0 %v532
        %v618 = vpop.f32.mrf.mxu0
        %v619 = vadd.f32 %v394, %v618
        %v620 = vpop.f32.mrf.mxu0
        %v621 = vadd.f32 %v394, %v620
        %622 = vmatmul.bf16.gmra.mxu0 %v535
        %v623 = vpop.f32.mrf.mxu0
        %v624 = vadd.f32 %v394, %v623
        %v625 = vpop.f32.mrf.mxu0
        %v626 = vadd.f32 %v394, %v625
        %627 = vmatmul.bf16.gmra.mxu0 %v538
        %v628 = vpop.f32.mrf.mxu0
        %v629 = vadd.f32 %v394, %v628
        %v630 = vpop.f32.mrf.mxu0
        %v631 = vadd.f32 %v394, %v630
        %632 = vdwg.mxu0
        %v633 = vmax.f32 %v554, 0.0
        %v634 = vmax.f32 %v556, 0.0
        %v635 = vmax.f32 %v559, 0.0
        %v636 = vmax.f32 %v561, 0.0
        %v637 = vmax.f32 %v564, 0.0
        %v638 = vmax.f32 %v566, 0.0
        %v639 = vmax.f32 %v569, 0.0
        %v640 = vmax.f32 %v571, 0.0
        %v641 = vmax.f32 %v574, 0.0
        %v642 = vmax.f32 %v576, 0.0
        %v643 = vmax.f32 %v579, 0.0
        %v644 = vmax.f32 %v581, 0.0
        %v645 = vmax.f32 %v584, 0.0
        %v646 = vmax.f32 %v586, 0.0
        %v647 = vmax.f32 %v589, 0.0
        %v648 = vmax.f32 %v591, 0.0
        %v649 = vmax.f32 %v594, 0.0
        %v650 = vmax.f32 %v596, 0.0
        %v651 = vmax.f32 %v599, 0.0
        %v652 = vmax.f32 %v601, 0.0
        %v653 = vmax.f32 %v604, 0.0
        %v654 = vmax.f32 %v606, 0.0
        %v655 = vmax.f32 %v609, 0.0
        %v656 = vmax.f32 %v611, 0.0
        %v657 = vmax.f32 %v614, 0.0
        %v658 = vmax.f32 %v616, 0.0
        %v659 = vmax.f32 %v619, 0.0
        %v660 = vmax.f32 %v621, 0.0
        %v661 = vmax.f32 %v624, 0.0
        %v662 = vmax.f32 %v626, 0.0
        %v663 = vmax.f32 %v629, 0.0
        %v664 = vmax.f32 %v631, 0.0
        %v665 = vld [vmem:[%s3] sm:$0x3]
        %v667 = vperm.slane %v665, 0
        %v668 = vperm.slane %v665, 1
        %671 = vmatpush.msra.mxu0 %v648
        %672 = vmatpush.msra.mxu0 %v647
        %673 = vmatpush.msra.mxu0 %v646
        %674 = vmatpush.msra.mxu0 %v645
        %675 = vmatpush.msra.mxu0 %v644
        %676 = vmatpush.msra.mxu0 %v643
        %677 = vmatpush.msra.mxu0 %v642
        %678 = vmatpush.msra.mxu0 %v641
        %679 = vmatpush.msra.mxu0 %v640
        %680 = vmatpush.msra.mxu0 %v639
        %681 = vmatpush.msra.mxu0 %v638
        %682 = vmatpush.msra.mxu0 %v637
        %683 = vmatpush.msra.mxu0 %v636
        %684 = vmatpush.msra.mxu0 %v635
        %685 = vmatpush.msra.mxu0 %v634
        %686 = vmatpush.msra.mxu0 %v633
        %687 = vmatmul.f32.gmra.mxu0 %v667
        %v688 = vpop.f32.mrf.mxu0
        %v689 = vadd.f32 0.0, %v688
        %690 = vdwg.mxu0
        %691 = vmatpush.msra.mxu0 %v664
        %692 = vmatpush.msra.mxu0 %v663
        %693 = vmatpush.msra.mxu0 %v662
        %694 = vmatpush.msra.mxu0 %v661
        %695 = vmatpush.msra.mxu0 %v660
        %696 = vmatpush.msra.mxu0 %v659
        %697 = vmatpush.msra.mxu0 %v658
        %698 = vmatpush.msra.mxu0 %v657
        %699 = vmatpush.msra.mxu0 %v656
        %700 = vmatpush.msra.mxu0 %v655
        %701 = vmatpush.msra.mxu0 %v654
        %702 = vmatpush.msra.mxu0 %v653
        %703 = vmatpush.msra.mxu0 %v652
        %704 = vmatpush.msra.mxu0 %v651
        %705 = vmatpush.msra.mxu0 %v650
        %706 = vmatpush.msra.mxu0 %v649
        %707 = vmatmul.f32.gmra.mxu0 %v668
        %v708 = vpop.f32.mrf.mxu0
        %v709 = vadd.f32 %v689, %v708
        %710 = vdwg.mxu0
        %vm711 = vcmask 253952
        %712 = vst.msk [vmem:[%s328] sm:$0x1] %vm711, %v709
        %v713 = vld [vmem:[%s4] sm:$0xff]
        %v714 = vld [vmem:[%s4 + $0x8] sm:$0xff]
        %v715 = vld [vmem:[%s4 + $0x10] sm:$0xff]
        %v716 = vld [vmem:[%s4 + $0x18] sm:$0xff]
        %v717 = vld [vmem:[%s5] sm:$0x1]
        %vm718 = vcmask 261120
        %v720 = vsel %vm718, %v709, 0
        %722 = vmatpush.msra.mxu0 0.0
        %723 = vmatpush.msra.mxu0 0.0
        %724 = vmatpush.msra.mxu0 0.0
        %725 = vmatpush.msra.mxu0 0.0
        %726 = vmatpush.msra.mxu0 0.0
        %727 = vmatpush.msra.mxu0 0.0
        %728 = vmatpush.msra.mxu0 0.0
        %729 = vmatpush.msra.mxu0 0.0
        %730 = vmatpush.msra.mxu0 0.0
        %731 = vmatpush.msra.mxu0 0.0
        %732 = vmatpush.msra.mxu0 0.0
        %733 = vmatpush.msra.mxu0 0.0
        %734 = vmatpush.msra.mxu0 %v716
        %735 = vmatpush.msra.mxu0 %v715
        %736 = vmatpush.msra.mxu0 %v714
        %737 = vmatpush.msra.mxu0 %v713
        %738 = vmatmul.f32.gmra.mxu0 %v720
        %v739 = vpop.f32.mrf.mxu0
        %v740 = vadd.f32 %v717, %v739
        %741 = vdwg.mxu0
        %vm742 = vcmask 57344
        %743 = vst.msk [vmem:[%s334] sm:$0x1] %vm742, %v740
        %v744 = vsel %vm742, %v740, -inf
        %745 = vmax.xlane.f32.xlu0 %v744
        %v746 = vpop.xlane.xlu0 %745
        %v747 = vsub.f32 %v740, %v746
        %v748 = vmul.f32 %v747, 1.442695
        %v749 = vpow.pop %v748
        %v750 = vsel %vm742, %v749, 0.0
        %751 = vadd.xlane.f32.xlu0 %v750
        %v752 = vpop.xlane.xlu0 %751
        %v753 = vrcp.pop %v752
        %v754 = vmul.f32 %v752, %v753
        %v755 = vsub.f32 1.0, %v754
        %v756 = vmul.f32 %v753, %v755
        %v757 = vadd.f32 %v753, %v756
        %vm758 = vweird.f32 %v752
        %vm759 = vweird.f32 %v753
        %vm760 = vmor %vm758, %vm759
        %v761 = vsel %vm760, %v753, %v757
        %v762 = vand.u32 2147483647, %v752
        %vm763 = vcmp.eq.f32.partialorder %v762, 8.507059e+37
        %v764 = vand.u32 %v752, 2147483648
        %v765 = vor.u32 1.1754944e-38, %v764
        %v766 = vsel %vm763, %v765, %v761
        %v767 = vmul.f32 %v749, %v766
        %768 = vst.msk [vmem:[%s340] sm:$0x1] %vm742, %v767
        %v769 = vlaneseq
        %v770 = vand.u32 %v769, 127
        %vm771 = vcmp.ge.s32.totalorder %v770, 6
        %v772 = vsel %vm771, %v767, 0.0
        %v773 = vsel %vm742, %v772, 0.0
        %774 = vadd.xlane.f32.xlu0 %v773
        %v775 = vpop.xlane.xlu0 %774
        %vm776 = vcmask 0
        %777 = vst.msk [vmem:[%s353] sm:$0x1] %vm776, %v775
        %s778 = sand.u32 %s166, 1
        %s779 = scalar_lea.sflag [#allocation3], %s778
        %s780 = sand.u32 %s166, 1
        %s781 = scalar_lea.vmem [#allocation2], %s780
        %s782 = sand.u32 %s27, 1
        %s783 = scalar_lea.sflag [#allocation5], %s782
        %s784 = sand.u32 %s192, 1
        %s785 = scalar_lea.vmem [#allocation4], %s784
        %s786 = sand.u32 %s27, 1
        %s787 = scalar_lea.sflag [#allocation5], %s786
        %s788 = sand.u32 %s218, 1
        %s789 = scalar_lea.vmem [#allocation6], %s788
        %p790 = scmp.lt.s32.totalorder %s27, 1
        %s791 = scalar_select %p790, %s27, 1
        %s792 = scalar_lea.vmem %s9, %s791
        // Predicated region
        $region45: #{hod_detector_forward.1} parent=43 // pred_check
          %p793 = pneg %p176
        $region46: #{hod_detector_forward.1} parent=43 // pred_check_branch
          %795 = sbr.rel (%p793) target = $region48
        $region47: #{hod_detector_forward.1} parent=43 // pred_region
          %797 = vsyncadd %s779, 0
          %s798 = scalar_lea.hbm %s6, %s27
          %s800 = sshll.u32 %s781, 4
          %s801 = int_to_ptr.vmem [resolvable:$true] %s800
          %s802 = sshll.u32 %s798, 4
          %s803 = int_to_ptr.hbm [resolvable:$true] %s802
          %805 = dma.vmem_to_hbm [thread:$0]  %s801, 16, %s803, %s779
        $region48: #{hod_detector_forward.1} parent=43 // pred_fallthru
          _
        // Predicated region
        $region49: #{hod_detector_forward.1} parent=43 // pred_check
          %p806 = pneg %p202
        $region50: #{hod_detector_forward.1} parent=43 // pred_check_branch
          %808 = sbr.rel (%p806) target = $region52
        $region51: #{hod_detector_forward.1} parent=43 // pred_region
          %810 = vsyncadd %s783, 0
          %s811 = scalar_lea.hbm %s7, %s27
          %s813 = sshll.u32 %s785, 4
          %s814 = int_to_ptr.vmem [resolvable:$true] %s813
          %s815 = sshll.u32 %s811, 4
          %s816 = int_to_ptr.hbm [resolvable:$true] %s815
          %818 = dma.vmem_to_hbm [thread:$0]  %s814, 16, %s816, %s783
        $region52: #{hod_detector_forward.1} parent=43 // pred_fallthru
          _
        // Predicated region
        $region53: #{hod_detector_forward.1} parent=43 // pred_check
          %p819 = pneg %p228
        $region54: #{hod_detector_forward.1} parent=43 // pred_check_branch
          %821 = sbr.rel (%p819) target = $region56
        $region55: #{hod_detector_forward.1} parent=43 // pred_region
          %823 = vsyncadd %s787, 0
          %s824 = scalar_lea.hbm %s8, %s27
          %s826 = sshll.u32 %s789, 4
          %s827 = int_to_ptr.vmem [resolvable:$true] %s826
          %s828 = sshll.u32 %s824, 4
          %s829 = int_to_ptr.hbm [resolvable:$true] %s828
          %831 = dma.vmem_to_hbm [thread:$0]  %s827, 16, %s829, %s787
        $region56: #{hod_detector_forward.1} parent=43 // pred_fallthru
          _
        // Predicated region
        $region57: #{hod_detector_forward.1} parent=43 // pred_check
          %p832 = pneg %p254
        $region58: #{hod_detector_forward.1} parent=43 // pred_check_branch
          %834 = sbr.rel (%p832) target = $region60
        $region59: #{hod_detector_forward.1} parent=43 // pred_region
          _
        $region60: #{hod_detector_forward.1} parent=43 // pred_fallthru
          _
      $region44: #{hod_detector_forward.1} parent=5 // pred_fallthru
        _
      %p835 = scmp.le.s32.totalorder 2, %s22
      // Predicated region
      $region61: #{hod_detector_forward.1} parent=5 // pred_check
        %p836 = pneg %p835
      $region62: #{hod_detector_forward.1} parent=5 // pred_check_branch
        %838 = sbr.rel (%p836) target = $region64
      $region63: #{hod_detector_forward.1} parent=5 // pred_region
        %s839 = ssub.s32 %s22, 2
        // Predicated region
        $region65: #{hod_detector_forward.1} parent=63 // pred_check
          %p840 = pneg %p182
        $region66: #{hod_detector_forward.1} parent=63 // pred_check_branch
          %842 = sbr.rel (%p840) target = $region68
        $region67: #{hod_detector_forward.1} parent=63 // pred_region
          %s843 = sand.u32 %s167, 1
          %s844 = scalar_lea.sflag [#allocation3], %s843
          %s845 = sand.u32 %s167, 1
          %s846 = scalar_lea.vmem [#allocation2], %s845
          %848 = dma.done %s844, 16
        $region68: #{hod_detector_forward.1} parent=63 // pred_fallthru
          _
        // Predicated region
        $region69: #{hod_detector_forward.1} parent=63 // pred_check
          %p849 = pneg %p208
        $region70: #{hod_detector_forward.1} parent=63 // pred_check_branch
          %851 = sbr.rel (%p849) target = $region72
        $region71: #{hod_detector_forward.1} parent=63 // pred_region
          %s852 = sand.u32 %s28, 1
          %s853 = scalar_lea.sflag [#allocation5], %s852
          %s854 = sand.u32 %s193, 1
          %s855 = scalar_lea.vmem [#allocation4], %s854
          %857 = dma.done %s853, 16
        $region72: #{hod_detector_forward.1} parent=63 // pred_fallthru
          _
        // Predicated region
        $region73: #{hod_detector_forward.1} parent=63 // pred_check
          %p858 = pneg %p234
        $region74: #{hod_detector_forward.1} parent=63 // pred_check_branch
          %860 = sbr.rel (%p858) target = $region76
        $region75: #{hod_detector_forward.1} parent=63 // pred_region
          %s861 = sand.u32 %s28, 1
          %s862 = scalar_lea.sflag [#allocation5], %s861
          %s863 = sand.u32 %s219, 1
          %s864 = scalar_lea.vmem [#allocation6], %s863
          %866 = dma.done %s862, 16
        $region76: #{hod_detector_forward.1} parent=63 // pred_fallthru
          _
        // Predicated region
        $region77: #{hod_detector_forward.1} parent=63 // pred_check
          %p867 = pneg %p260
        $region78: #{hod_detector_forward.1} parent=63 // pred_check_branch
          %869 = sbr.rel (%p867) target = $region80
        $region79: #{hod_detector_forward.1} parent=63 // pred_region
          %p870 = scmp.lt.s32.totalorder %s28, 1
          %s871 = scalar_select %p870, %s28, 1
          %s872 = scalar_lea.vmem %s9, %s871
        $region80: #{hod_detector_forward.1} parent=63 // pred_fallthru
          _
      $region64: #{hod_detector_forward.1} parent=5 // pred_fallthru
        _
    $region6: #{hod_detector_forward.1} parent=1 // loop_footer
      %s26 = sadd.s32 1, %s22
    $region7: #{hod_detector_forward.1} parent=1 // loop_footer_branch
      %21 = sbr.rel target = $region3
    $region8: #{hod_detector_forward.1} parent=1 // loop_exit
      _
    %873 = vsyncpa [#allocation3], 1
    %s874 = scalar_lea.sflag [#allocation3], 1
    %875 = vsyncpa %s874, 1
    %876 = vsyncpa [#allocation5], 1
    %s877 = scalar_lea.sflag [#allocation5], 1
    %878 = vsyncpa %s877, 1

</llo_original>
